<compile_context>
chip_gen: v7x
topology: tpu7x:2x2x1
jax: 0.10.0
libtpu: 0.0.40
codegen_flags: <defaults>
</compile_context>

<pallas_src>
import functools

import jax
import jax.numpy as jnp
from jax import lax
from jax.experimental import pallas as pl
from jax.experimental.pallas import tpu as pltpu


def _round_up(x, m):
    return ((x + m - 1) // m) * m


def _block_nll_sum(pred_blk, tgt_blk, base, n):
    """Sum of pred[r, tgt[r]] over the valid rows of one (tile_n, C) block.

    pred_blk: (tile_n, C) log-probs (any float dtype; cast to f32 in-vreg)
    tgt_blk:  (tile_n, 1) int32 class indices
    base:     global row index of the first row of this block
    n:        true batch size (rows >= n are masked out)
    """
    tile_n, c = pred_blk.shape
    lane = lax.broadcasted_iota(jnp.int32, (1, c), 1)              # (1, C)
    rows = base + lax.broadcasted_iota(jnp.int32, (tile_n, 1), 0)  # (tile_n, 1)
    valid = rows < n                                               # mask ragged tail
    sel = jnp.logical_and(lane == tgt_blk, valid)                  # (tile_n, C)
    # select (NOT multiply-by-mask) so NaN/-inf garbage in clamped tail rows
    # of the edge block can never leak into the sum.
    picked = jnp.where(sel, pred_blk.astype(jnp.float32), jnp.float32(0.0))
    return jnp.sum(picked)


def _nll_single_tile_kernel(n, tgt_ref, pred_ref, out_ref):
    # tgt_ref : (n, 1) int32 in VMEM
    # pred_ref: (n, c) log-probs in VMEM
    # out_ref : (1, 1) float32 in SMEM
    s = _block_nll_sum(pred_ref[...], tgt_ref[...], 0, n)
    out_ref[0, 0] = -s / jnp.float32(n)


def _nll_tiled_kernel(n, tile_n, tgt_ref, pred_ref, out_ref, acc_ref):
    # tgt_ref : (tile_n, 1) int32 tile in VMEM
    # pred_ref: (tile_n, c) log-prob tile in VMEM
    # out_ref : (1, 1) float32 in SMEM (final scalar loss)
    # acc_ref : (1,)   float32 SMEM scratch (running sum, persists over grid)
    step = pl.program_id(0)

    @pl.when(step == 0)
    def _init():
        acc_ref[0] = jnp.float32(0.0)

    base = step * tile_n
    acc_ref[0] = acc_ref[0] + _block_nll_sum(pred_ref[...], tgt_ref[...], base, n)

    @pl.when(step == pl.num_programs(0) - 1)
    def _finalize():
        out_ref[0, 0] = -acc_ref[0] / jnp.float32(n)


def nll_loss_pallas(pred, target, trans_feat=None, *, max_tile_n=4096):
    """Equivalent of F.nll_loss(pred, target) with the default 'mean' reduction.

    pred:   (N, C) float log-probabilities (f32 or bf16; cast to f32 in-kernel)
    target: (N,)   integer class indices in [0, C)
    trans_feat: ignored (matches the PyTorch module).
    """
    del trans_feat  # unused, same as the reference module
    n, c = pred.shape
    target_col = target.astype(jnp.int32).reshape(n, 1)

    itemsize = jnp.dtype(pred.dtype).itemsize
    c_lanes = _round_up(c, 128)
    cost = pl.CostEstimate(
        flops=2 * n * c,
        transcendentals=0,
        bytes_accessed=n * c * itemsize + n * 4 + 4,
    )

    if n <= max_tile_n:
        # ---- single-tile fast path: gridless, no accumulator, no pl.when ----
        vmem_limit = int(
            max(4 * n * (c_lanes * itemsize + 128 * 4), 2 * 1024 * 1024)
        )
        out = pl.pallas_call(
            functools.partial(_nll_single_tile_kernel, n),
            out_shape=jax.ShapeDtypeStruct((1, 1), jnp.float32),
            in_specs=[
                pl.BlockSpec(memory_space=pltpu.MemorySpace.VMEM),  # target (n,1)
                pl.BlockSpec(memory_space=pltpu.MemorySpace.VMEM),  # pred (n,c)
            ],
            out_specs=pl.BlockSpec(memory_space=pltpu.MemorySpace.SMEM),
            compiler_params=pltpu.CompilerParams(vmem_limit_bytes=vmem_limit),
            cost_estimate=cost,
        )(target_col, pred)
        return out[0, 0]

    # ---- streamed path: 1-D "arbitrary" grid, balanced tiles ----
    # Balance tiles to minimize last-tile waste; round to 16 rows so bf16
    # (16, 128) sublane packing never forces a relayout.
    num_tiles = pl.cdiv(n, max_tile_n)
    tile_n = _round_up(pl.cdiv(n, num_tiles), 16)
    num_tiles = pl.cdiv(n, tile_n)

    # 2x double buffering, 2x headroom, 2 MiB floor; pred tile + target tile.
    vmem_limit = int(
        max(4 * tile_n * (c_lanes * itemsize + 128 * 4), 2 * 1024 * 1024)
    )

    out = pl.pallas_call(
        functools.partial(_nll_tiled_kernel, n, tile_n),
        out_shape=jax.ShapeDtypeStruct((1, 1), jnp.float32),
        grid_spec=pltpu.PrefetchScalarGridSpec(
            num_scalar_prefetch=0,
            grid=(num_tiles,),
            in_specs=[
                pl.BlockSpec((tile_n, 1), lambda i: (i, 0)),  # target column
                pl.BlockSpec((tile_n, c), lambda i: (i, 0)),  # pred tile
            ],
            out_specs=pl.BlockSpec(memory_space=pltpu.MemorySpace.SMEM),
            scratch_shapes=[pltpu.SMEM((1,), jnp.float32)],
        ),
        compiler_params=pltpu.CompilerParams(
            dimension_semantics=("arbitrary",),  # sequential accumulation
            vmem_limit_bytes=vmem_limit,
        ),
        cost_estimate=cost,
    )(target_col, pred)
    return out[0, 0]


if __name__ == "__main__":
    key = jax.random.PRNGKey(0)
    k1, k2, k3, k4, k5, k6, k7 = jax.random.split(key, 7)

    # 1) Small shapes consistent with the classifier head (fast path).
    N, C = 8, 16
    logits = jax.random.normal(k1, (N, C), dtype=jnp.float32)
    pred = jax.nn.log_softmax(logits, axis=-1)
    target = jax.random.randint(k2, (N,), 0, C, dtype=jnp.int32)
    trans_feat = jax.random.normal(k3, (N, 3, 3), dtype=jnp.float32)  # unused
    loss = jax.block_until_ready(nll_loss_pallas(pred, target, trans_feat))
    ref = -jnp.mean(pred[jnp.arange(N), target])
    assert jnp.allclose(loss, ref, atol=1e-6), (loss, ref)

    # 2) Ragged batch through the gridded/tiled path (4 tiles of 256, last
    #    tile partial) -- exercises the edge-block masking with no pred pad.
    N2, C2 = 1000, 40
    logits2 = jax.random.normal(k4, (N2, C2), dtype=jnp.float32)
    pred2 = jax.nn.log_softmax(logits2, axis=-1)
    target2 = jax.random.randint(k5, (N2,), 0, C2, dtype=jnp.int32)
    loss2 = jax.block_until_ready(nll_loss_pallas(pred2, target2, None, max_tile_n=256))
    ref2 = -jnp.mean(pred2[jnp.arange(N2), target2])
    assert jnp.allclose(loss2, ref2, atol=1e-5, rtol=1e-5), (loss2, ref2)

    # 3) bf16 log-probs: in-kernel cast to f32 (fast path).
    N3, C3 = 24, 40
    logits3 = jax.random.normal(k6, (N3, C3), dtype=jnp.float32)
    pred3 = jax.nn.log_softmax(logits3, axis=-1).astype(jnp.bfloat16)
    target3 = jax.random.randint(k7, (N3,), 0, C3, dtype=jnp.int32)
    loss3 = jax.block_until_ready(nll_loss_pallas(pred3, target3, None))
    ref3 = -jnp.mean(pred3.astype(jnp.float32)[jnp.arange(N3), target3])
    assert jnp.allclose(loss3, ref3, atol=1e-5, rtol=1e-5), (loss3, ref3)

    print("KERNEL_OK")
</pallas_src>

<mosaic_0001>
module attributes {stable_mosaic.version = 11 : i64} {
  func.func @_nll_single_tile_kernel(%arg0: memref<8x1xi32, #tpu.memory_space<vmem>>, %arg1: memref<8x16xf32, #tpu.memory_space<vmem>>, %arg2: memref<1x1xf32, #tpu.memory_space<smem>>) attributes {dimension_semantics = [], scalar_prefetch = 0 : i64, scratch_operands = 0 : i64, tpu.core_type = #tpu.core_type<tc>} {
    %c0 = arith.constant 0 : index
    %c0_0 = arith.constant 0 : index
    %0 = vector.load %arg1[%c0, %c0_0] : memref<8x16xf32, #tpu.memory_space<vmem>>, vector<8x16xf32>
    %c0_1 = arith.constant 0 : index
    %c0_2 = arith.constant 0 : index
    %1 = vector.load %arg0[%c0_1, %c0_2] : memref<8x1xi32, #tpu.memory_space<vmem>>, vector<8x1xi32>
    %2 = tpu.iota {dimensions = array<i32: 1>} : vector<1x16xi32>
    %3 = tpu.iota {dimensions = array<i32: 0>} : vector<8x1xi32>
    %c0_i32 = arith.constant 0 : i32
    %4 = vector.broadcast %c0_i32 : i32 to vector<8x1xi32>
    %5 = arith.addi %4, %3 : vector<8x1xi32>
    %c8_i32 = arith.constant 8 : i32
    %6 = vector.broadcast %c8_i32 : i32 to vector<8x1xi32>
    %7 = arith.cmpi slt, %5, %6 : vector<8x1xi32>
    %8 = vector.broadcast %2 : vector<1x16xi32> to vector<8x16xi32>
    %9 = vector.broadcast %1 : vector<8x1xi32> to vector<8x16xi32>
    %10 = arith.cmpi eq, %8, %9 : vector<8x16xi32>
    %11 = vector.broadcast %7 : vector<8x1xi1> to vector<8x16xi1>
    %12 = arith.andi %10, %11 : vector<8x16xi1>
    %cst = arith.constant 0.000000e+00 : f32
    %13 = vector.broadcast %cst : f32 to vector<8x16xf32>
    %14 = arith.select %12, %0, %13 : vector<8x16xi1>, vector<8x16xf32>
    %15 = vector.shape_cast %14 : vector<8x16xf32> to vector<1x8x16xf32>
    %cst_3 = arith.constant dense<0.000000e+00> : vector<1xf32>
    %16 = vector.multi_reduction <add>, %15, %cst_3 [1, 2] : vector<1x8x16xf32> to vector<1xf32>
    %17 = vector.shape_cast %16 : vector<1xf32> to vector<1x1x1xf32>
    %18 = vector.extract %17[0, 0, 0] : f32 from vector<1x1x1xf32>
    %cst_4 = arith.constant 0.000000e+00 : f32
    %19 = arith.subf %cst_4, %18 : f32
    %cst_5 = arith.constant 8.000000e+00 : f32
    %20 = arith.divf %19, %cst_5 : f32
    %c0_6 = arith.constant 0 : index
    %c0_7 = arith.constant 0 : index
    %21 = memref.load %arg2[%c0_6, %c0_7] : memref<1x1xf32, #tpu.memory_space<smem>>
    memref.store %20, %arg2[%c0_6, %c0_7] : memref<1x1xf32, #tpu.memory_space<smem>>
    return
  }
}

</mosaic_0001>

<llo_original>
// kernel: tpu_custom_call.1
$region0: #{tpu_custom_call.1}
  #allocation0 [shape = 'u32[]', space=smem, size = 0x4, offset = 0x4, fixed_abs, tag = 'smem constant byte address 0x4 - core index']
  #allocation1 [shape = 'u32[144,128]{1,0:T(1,128)}', space=vmem, size = 0x12000, scoped, tag = 'internal scratch']
  %s0 = inlined_call_operand.vmem [shape: s32[8,1], index: 0, kind: input, shape index: {}]
  %s1 = inlined_call_operand.vmem [shape: f32[8,16], index: 1, kind: input, shape index: {}]
  %s2 = inlined_call_operand.hbm [shape: f32[1,1], index: 2, kind: output, shape index: {}]
  %s3 = sld [smem:[#allocation0]]
  $region18: #{tpu_custom_call.1} parent=0
    _
  %s5 = ssub.s32 1, %s3
  %s6 = scalar_select 0, %s5, %s3
  $region1: #{tpu_custom_call.1} parent=0
    #allocation2 [shape = 'u8[512]{0}', space=smem, size = 0x200, scoped, tag = 'output window, operand 0, single buffered']
    #allocation3 [shape = 's32[1]{0}', space=sflag, size = 0x4, scoped, tag = 'scoped memory for tpu_custom_call.1']
    %7 = vsyncpa [#allocation3], 0
    // Predicated region
    $region2: #{tpu_custom_call.1} parent=1 // pred_check
      _
    $region3: #{tpu_custom_call.1} parent=1 // pred_check_branch
      %9 = sbr.rel (0) target = $region5
    $region4: #{tpu_custom_call.1} parent=1 // pred_region
      _
    $region5: #{tpu_custom_call.1} parent=1 // pred_fallthru
      _
    // Predicated region
    $region6: #{tpu_custom_call.1} parent=1 // pred_check
      _
    $region7: #{tpu_custom_call.1} parent=1 // pred_check_branch
      %11 = sbr.rel (0) target = $region9
    $region8: #{tpu_custom_call.1} parent=1 // pred_region
      _
    $region9: #{tpu_custom_call.1} parent=1 // pred_fallthru
      _
    %v12 = vld [vmem:[%s1] sm:$0xff]
    %v13 = vld [vmem:[%s0] sm:$0xff]
    %v14 = vlaneseq
    %v15 = vand.u32 %v14, 127
    %v16 = vlaneseq
    %v17 = vshrl.u32 %v16, 7
    %vm18 = vcmp.lt.s32.totalorder %v17, 8
    %19 = vset.pattern.permute.xlu0 0
    %20 = vperm.xlu0 %19, %v13
    %v21 = vpop.permute.xlu0 %20
    %vm22 = vcmp.eq.s32.totalorder %v15, %v21
    %v23 = vsel %vm18, 1, 0
    %vm24 = vcmp.eq.s32.totalorder %v23, 1
    %vm25 = vmand %vm22, %vm24
    %v26 = vsel %vm25, %v12, 0.0
    %vm27 = vcmask 130048
    %v28 = vsel %vm27, %v26, 0.0
    %29 = vadd.xlane.f32.xlu0 %v28
    %v30 = vpop.xlane.xlu0 %29
    %v31 = vrot.slane %v30, 4
    %v32 = vadd.f32 %v30, %v31
    %v33 = vrot.slane %v32, 2
    %v34 = vadd.f32 %v32, %v33
    %v35 = vrot.slane %v34, 1
    %v36 = vadd.f32 %v34, %v35
    %s37 = vtos %v36
    %s38 = ssub.f32 0.0, %s37
    %v39 = vrcp.pop 8.0
    %s40 = vtos %v39
    %s41 = smul.f32 %s38, %s40
    %s42 = scalar_lea.smem [#allocation2], 0
    %43 = sst [smem:[%s42]] %s41
    // Predicated region
    $region10: #{tpu_custom_call.1} parent=1 // pred_check
      _
    $region11: #{tpu_custom_call.1} parent=1 // pred_check_branch
      %45 = sbr.rel (0) target = $region13
    $region12: #{tpu_custom_call.1} parent=1 // pred_region
      %s47 = ssub.s32 16, 16
      %48 = vsyncadd [#allocation3], %s47
      %51 = dma.smem_to_hbm [#allocation2], 16, %s2, [#allocation3]
    $region13: #{tpu_custom_call.1} parent=1 // pred_fallthru
      _
    // Predicated region
    $region14: #{tpu_custom_call.1} parent=1 // pred_check
      _
    $region15: #{tpu_custom_call.1} parent=1 // pred_check_branch
      %53 = sbr.rel (0) target = $region17
    $region16: #{tpu_custom_call.1} parent=1 // pred_region
      %54 = dma.done [#allocation3], 16
    $region17: #{tpu_custom_call.1} parent=1 // pred_fallthru
      _
    %55 = sfence
    %56 = vsyncpa [#allocation3], 1

</llo_original>
